<compile_context>
chip_gen: v7x
topology: tpu7x:2x2x1
jax: 0.10.0
libtpu: 0.0.40
codegen_flags: <defaults>
</compile_context>

<pallas_src>
import functools

import jax
import jax.numpy as jnp
from jax.experimental import pallas as pl
from jax.experimental.pallas import tpu as pltpu


def _round_up(x, m):
    return (x + m - 1) // m * m


def _pad_to(x, shape):
    pads = [(0, t - s) for s, t in zip(x.shape, shape)]
    if any(p[1] for p in pads):
        return jnp.pad(x, pads)
    return x


def fc_decoder_kernel(z_ref, w3_ref, b3_ref, w4_ref, b4_ref, o_ref, acc_ref,
                      *, mm_dtype, exact_sigmoid):
    h = pl.program_id(1)

    @pl.when(h == 0)
    def _():
        acc_ref[...] = jnp.zeros_like(acc_ref)

    # fc3 chunk: relu(z @ W3[:, chunk] + b3[chunk]).  z is read as f32 from HBM
    # (no wrapper-side cast pass) and cast to the MXU dtype in-register; the
    # elementwise epilogue stays f32 (v5e has no bf16 VPU/EUP).
    zc = z_ref[...].astype(mm_dtype)
    h3 = jnp.dot(zc, w3_ref[...], preferred_element_type=jnp.float32)
    h3 = jnp.maximum(h3 + b3_ref[...], 0.0)

    # fc4 partial for this hidden chunk, accumulated in f32.
    acc_ref[...] += jnp.dot(h3.astype(mm_dtype), w4_ref[...],
                            preferred_element_type=jnp.float32)

    @pl.when(h == pl.num_programs(1) - 1)
    def _():
        logits = acc_ref[...] + b4_ref[...]
        if exact_sigmoid:
            out = 1.0 / (1.0 + jnp.exp(-logits))
        else:
            # exp and approx reciprocal both run on the otherwise-idle EUP slot.
            out = pl.reciprocal(1.0 + jnp.exp(-logits), approx=True)
        o_ref[...] = out.astype(o_ref.dtype)


def prepare_fc_decoder_params(w3, b3, w4, b4, *, use_bf16=True):
    """Pad / cast the two Linear layers ONCE (outside the per-call hot path).

    w3: (E, H); b3: (H,) or (1, H); w4: (H, O); b4: (O,) or (1, O).
    All three feature dims are zero-padded to multiples of 128 (exactness
    preserved: relu(0)=0 and zero w4 rows/cols contribute nothing).
    """
    E, H = w3.shape
    O = w4.shape[1]
    E_pad, H_pad, O_pad = (_round_up(d, 128) for d in (E, H, O))
    mm_dtype = jnp.bfloat16 if use_bf16 else jnp.dtype(w3.dtype)
    b3 = jnp.asarray(b3).reshape(1, H)
    b4 = jnp.asarray(b4).reshape(1, O)
    return {
        "w3": _pad_to(w3, (E_pad, H_pad)).astype(mm_dtype),
        "b3": _pad_to(b3, (1, H_pad)).astype(jnp.float32),
        "w4": _pad_to(w4, (H_pad, O_pad)).astype(mm_dtype),
        "b4": _pad_to(b4, (1, O_pad)).astype(jnp.float32),
        "dims": (E, H, O),
        "mm_dtype": mm_dtype,
    }


def _vmem_budget_bytes():
    # Generation-aware: ~48 MiB on v7x (64 MiB/TC), ~96 MiB on v5e/v6e (128 MiB).
    try:
        return int(pltpu.get_tpu_info().vmem_capacity_bytes * 0.75)
    except Exception:
        return 48 * 1024 * 1024


def _choose_tiles(B, E_pad, H_pad, O_pad, mm_bytes, z_bytes, out_bytes, budget,
                  block_b):
    """Pick (batch tile TB, hidden chunk TH) against an explicit VMEM budget."""

    def est(tb, th):
        n_h = H_pad // th
        wbuf = 1 if n_h == 1 else 2               # grid-invariant weights -> 1 buffer
        wgt = wbuf * ((E_pad * th + th * O_pad) * mm_bytes + th * 4) + O_pad * 4
        zin = 2 * tb * E_pad * z_bytes + tb * E_pad * mm_bytes   # f32 tiles + bf16 cast
        mid = tb * th * (4 + mm_bytes)            # f32 h3 + bf16 copy of h3
        acc = 2 * tb * O_pad * 4                  # f32 accumulator + dot partial
        outp = 2 * tb * O_pad * out_bytes         # double-buffered output tile
        return wgt + zin + mid + acc + outp

    tb_cap = max(_round_up(min(block_b, B), 16), 16)   # multiple of 16 (bf16 sublanes)
    tb_floor = min(256, tb_cap)                        # keep the 256-wide MXU M dim fed

    # Hidden chunk: largest multiple of 128 that divides H_pad and fits the budget.
    units = H_pad // 128
    th_candidates = sorted({(units // d) * 128 for d in range(1, units + 1)
                            if units % d == 0}, reverse=True)
    TB = tb_cap
    TH = th_candidates[-1]
    for th in th_candidates:
        if est(TB, th) <= budget:
            TH = th
            break
    # If still over budget, shrink the batch tile down to the MXU-friendly floor.
    while TB > tb_floor and est(TB, TH) > budget:
        TB = max(_round_up(TB // 2, 16), 16)
    return TB, TH


def fc_decoder_apply(z, params, *, block_b=512, exact_sigmoid=False,
                     vmem_budget_bytes=None, interpret=False):
    """sigmoid(relu(z @ W3 + b3) @ W4 + b4) with pre-prepared params."""
    E, H, O = params["dims"]
    w3, b3, w4, b4 = params["w3"], params["b3"], params["w4"], params["b4"]
    mm_dtype = params["mm_dtype"]
    E_pad, H_pad = w3.shape
    O_pad = w4.shape[1]

    B, Ez = z.shape
    assert Ez == E, f"z feature dim {Ez} != embedding_size {E}"
    out_dtype = z.dtype
    z_bytes = jnp.dtype(z.dtype).itemsize
    mm_bytes = jnp.dtype(mm_dtype).itemsize
    out_bytes = jnp.dtype(out_dtype).itemsize

    budget = vmem_budget_bytes if vmem_budget_bytes else _vmem_budget_bytes()
    TB, TH = _choose_tiles(B, E_pad, H_pad, O_pad, mm_bytes, z_bytes, out_bytes,
                           budget, block_b)

    B_pad = _round_up(B, TB)
    z_p = _pad_to(z, (B_pad, E_pad))        # lane-dense E, batch rounded to tile
    n_b, n_h = B_pad // TB, H_pad // TH

    kernel = functools.partial(fc_decoder_kernel, mm_dtype=mm_dtype,
                               exact_sigmoid=exact_sigmoid)

    cost = pl.CostEstimate(
        flops=2 * B_pad * (E_pad * H_pad + H_pad * O_pad),
        transcendentals=B_pad * O_pad,
        bytes_accessed=(z_p.size * z_bytes + w3.size * mm_bytes + w4.size * mm_bytes
                        + b3.size * 4 + b4.size * 4 + B_pad * O_pad * out_bytes),
    )

    def build(use_single_buffer):
        def inv_spec(shape, imap):
            # Grid-invariant operands: single-buffer them (double-buffering a
            # block whose index never changes is pure VMEM waste).
            if use_single_buffer:
                return pl.BlockSpec(shape, imap, pipeline_mode=pl.Buffered(1))
            return pl.BlockSpec(shape, imap)

        # Weights are grid-invariant only when the hidden dim is a single chunk.
        w_spec = inv_spec if n_h == 1 else pl.BlockSpec
        in_specs = [
            pl.BlockSpec((TB, E_pad), lambda i, h: (i, 0)),   # z tile (f32, pipelined)
            w_spec((E_pad, TH), lambda i, h: (0, h)),         # w3 chunk
            w_spec((1, TH), lambda i, h: (0, h)),             # b3 chunk
            w_spec((TH, O_pad), lambda i, h: (h, 0)),         # w4 chunk
            inv_spec((1, O_pad), lambda i, h: (0, 0)),        # b4 (grid-invariant)
        ]
        grid_spec = pltpu.PrefetchScalarGridSpec(
            num_scalar_prefetch=0,
            grid=(n_b, n_h),
            in_specs=in_specs,
            out_specs=pl.BlockSpec((TB, O_pad), lambda i, h: (i, 0)),
            scratch_shapes=[pltpu.VMEM((TB, O_pad), jnp.float32)],
        )
        return pl.pallas_call(
            kernel,
            out_shape=jax.ShapeDtypeStruct((B_pad, O_pad), out_dtype),
            grid_spec=grid_spec,
            compiler_params=pltpu.CompilerParams(
                dimension_semantics=("parallel", "arbitrary"),
                vmem_limit_bytes=budget,
            ),
            cost_estimate=cost,
            interpret=interpret,
        )

    try:
        out = build(True)(z_p, w3, b3, w4, b4)
    except Exception:
        # Conservative fallback if single-buffered operands are unsupported in
        # this jax build; only costs extra VMEM for the resident weights.
        out = build(False)(z_p, w3, b3, w4, b4)

    return out[:B, :O]


def fc_decoder(z, w3, b3, w4, b4, *, use_bf16=True, **kwargs):
    """Convenience one-shot wrapper: prepare params then apply."""
    params = prepare_fc_decoder_params(w3, b3, w4, b4, use_bf16=use_bf16)
    return fc_decoder_apply(z, params, **kwargs)


def init_params(key, embedding_size, hidden_size, output_size):
    """Deterministic PyTorch-style (Kaiming-uniform-ish) init for the two Linears."""
    k1, k2, k3, k4 = jax.random.split(key, 4)
    bound3 = 1.0 / jnp.sqrt(embedding_size)
    bound4 = 1.0 / jnp.sqrt(hidden_size)
    # Stored transposed relative to torch.nn.Linear.weight: (in, out).
    w3 = jax.random.uniform(k1, (embedding_size, hidden_size), jnp.float32,
                            -bound3, bound3)
    b3 = jax.random.uniform(k2, (1, hidden_size), jnp.float32, -bound3, bound3)
    w4 = jax.random.uniform(k3, (hidden_size, output_size), jnp.float32,
                            -bound4, bound4)
    b4 = jax.random.uniform(k4, (1, output_size), jnp.float32, -bound4, bound4)
    return w3, b3, w4, b4


if __name__ == "__main__":
    # Small shapes consistent with FC_Decoder(embedding_size, output_size, hidden_size).
    # Note: this size is overhead-dominated; the kernel is built for large B/H.
    batch = 8
    embedding_size = 32
    hidden_size = 64
    output_size = 128

    key = jax.random.PRNGKey(0)
    kz, kp = jax.random.split(key)
    z = jax.random.normal(kz, (batch, embedding_size), jnp.float32)
    w3, b3, w4, b4 = init_params(kp, embedding_size, hidden_size, output_size)

    # Prepare (pad + bf16-cast) weights once, then apply.
    params = prepare_fc_decoder_params(w3, b3, w4, b4, use_bf16=True)
    out = fc_decoder_apply(z, params)
    out = jax.block_until_ready(out)

    # Pure-JAX f32 reference check (tolerance loosened for bf16 MXU operands
    # and the approximate EUP reciprocal).
    ref = jax.nn.sigmoid(jnp.maximum(z @ w3 + b3, 0.0) @ w4 + b4)
    assert out.shape == (batch, output_size)
    assert jnp.allclose(out, ref, atol=2e-2, rtol=2e-2)

    print("KERNEL_OK")
</pallas_src>

<mosaic_0001>
module attributes {stable_mosaic.version = 11 : i64} {
  func.func @fc_decoder_kernel(%arg0: i32, %arg1: i32, %arg2: memref<16x128xf32, #tpu.memory_space<vmem>>, %arg3: memref<128x128xbf16, #tpu.memory_space<vmem>>, %arg4: memref<1x128xf32, #tpu.memory_space<vmem>>, %arg5: memref<128x128xbf16, #tpu.memory_space<vmem>>, %arg6: memref<1x128xf32, #tpu.memory_space<vmem>>, %arg7: memref<16x128xf32, #tpu.memory_space<vmem>>, %arg8: memref<16x128xf32, #tpu.memory_space<vmem>>) attributes {dimension_semantics = [#tpu.dimension_semantics<parallel>, #tpu.dimension_semantics<arbitrary>], iteration_bounds = array<i64: 1, 1>, scalar_prefetch = 0 : i64, scratch_operands = 1 : i64, tpu.core_type = #tpu.core_type<tc>, window_params = [{transform_indices = @transform_0, window_bounds = array<i64: 16, 128>}, {pipeline_mode = #tpu.pipeline_mode<synchronous>, transform_indices = @transform_1, window_bounds = array<i64: 128, 128>}, {pipeline_mode = #tpu.pipeline_mode<synchronous>, transform_indices = @transform_2, window_bounds = array<i64: 1, 128>}, {pipeline_mode = #tpu.pipeline_mode<synchronous>, transform_indices = @transform_3, window_bounds = array<i64: 128, 128>}, {pipeline_mode = #tpu.pipeline_mode<synchronous>, transform_indices = @transform_4, window_bounds = array<i64: 1, 128>}, {transform_indices = @transform_5, window_bounds = array<i64: 16, 128>}]} {
    %c0_i32 = arith.constant 0 : i32
    %0 = arith.cmpi eq, %arg1, %c0_i32 : i32
    %1 = arith.extui %0 : i1 to i32
    %c0_i32_0 = arith.constant 0 : i32
    %2 = arith.cmpi ne, %1, %c0_i32_0 : i32
    scf.if %2 {
      %cst_16 = arith.constant 0.000000e+00 : f32
      %21 = vector.broadcast %cst_16 : f32 to vector<16x128xf32>
      %c0_17 = arith.constant 0 : index
      %c0_18 = arith.constant 0 : index
      %22 = vector.load %arg8[%c0_17, %c0_18] : memref<16x128xf32, #tpu.memory_space<vmem>>, vector<16x128xf32>
      tpu.vector_store %arg8[%c0_17, %c0_18], %21 {strides = array<i32>} : memref<16x128xf32, #tpu.memory_space<vmem>>, vector<16x128xf32>,
    } else {
    }
    %c0 = arith.constant 0 : index
    %c0_1 = arith.constant 0 : index
    %3 = vector.load %arg2[%c0, %c0_1] : memref<16x128xf32, #tpu.memory_space<vmem>>, vector<16x128xf32>
    %4 = arith.truncf %3 : vector<16x128xf32> to vector<16x128xbf16>
    %c0_2 = arith.constant 0 : index
    %c0_3 = arith.constant 0 : index
    %5 = vector.load %arg3[%c0_2, %c0_3] : memref<128x128xbf16, #tpu.memory_space<vmem>>, vector<128x128xbf16>
    %cst = arith.constant dense<0.000000e+00> : vector<16x128xf32>
    %6 = tpu.matmul %4, %5, %cst {dimension_numbers = #tpu.dot_dimension_numbers<[1], [0], [0], [1], [0, 0, 1, 1], [], []>} : vector<16x128xbf16>, vector<128x128xbf16>, vector<16x128xf32> -> vector<16x128xf32>
    %c0_4 = arith.constant 0 : index
    %c0_5 = arith.constant 0 : index
    %7 = vector.load %arg4[%c0_4, %c0_5] : memref<1x128xf32, #tpu.memory_space<vmem>>, vector<1x128xf32>
    %8 = vector.broadcast %7 : vector<1x128xf32> to vector<16x128xf32>
    %9 = arith.addf %6, %8 : vector<16x128xf32>
    %cst_6 = arith.constant 0.000000e+00 : f32
    %10 = vector.broadcast %cst_6 : f32 to vector<16x128xf32>
    %11 = arith.maximumf %9, %10 : vector<16x128xf32>
    %c0_7 = arith.constant 0 : index
    %c0_8 = arith.constant 0 : index
    %12 = vector.load %arg8[%c0_7, %c0_8] : memref<16x128xf32, #tpu.memory_space<vmem>>, vector<16x128xf32>
    %13 = arith.truncf %11 : vector<16x128xf32> to vector<16x128xbf16>
    %c0_9 = arith.constant 0 : index
    %c0_10 = arith.constant 0 : index
    %14 = vector.load %arg5[%c0_9, %c0_10] : memref<128x128xbf16, #tpu.memory_space<vmem>>, vector<128x128xbf16>
    %cst_11 = arith.constant dense<0.000000e+00> : vector<16x128xf32>
    %15 = tpu.matmul %13, %14, %cst_11 {dimension_numbers = #tpu.dot_dimension_numbers<[1], [0], [0], [1], [0, 0, 1, 1], [], []>} : vector<16x128xbf16>, vector<128x128xbf16>, vector<16x128xf32> -> vector<16x128xf32>
    %16 = arith.addf %12, %15 : vector<16x128xf32>
    %c0_12 = arith.constant 0 : index
    %c0_13 = arith.constant 0 : index
    %17 = vector.load %arg8[%c0_12, %c0_13] : memref<16x128xf32, #tpu.memory_space<vmem>>, vector<16x128xf32>
    tpu.vector_store %arg8[%c0_12, %c0_13], %16 {strides = array<i32>} : memref<16x128xf32, #tpu.memory_space<vmem>>, vector<16x128xf32>,
    %c0_i32_14 = arith.constant 0 : i32
    %18 = arith.cmpi eq, %arg1, %c0_i32_14 : i32
    %19 = arith.extui %18 : i1 to i32
    %c0_i32_15 = arith.constant 0 : i32
    %20 = arith.cmpi ne, %19, %c0_i32_15 : i32
    scf.if %20 {
      %c0_16 = arith.constant 0 : index
      %c0_17 = arith.constant 0 : index
      %21 = vector.load %arg8[%c0_16, %c0_17] : memref<16x128xf32, #tpu.memory_space<vmem>>, vector<16x128xf32>
      %c0_18 = arith.constant 0 : index
      %c0_19 = arith.constant 0 : index
      %22 = vector.load %arg6[%c0_18, %c0_19] : memref<1x128xf32, #tpu.memory_space<vmem>>, vector<1x128xf32>
      %23 = vector.broadcast %22 : vector<1x128xf32> to vector<16x128xf32>
      %24 = arith.addf %21, %23 : vector<16x128xf32>
      %cst_20 = arith.constant 0.000000e+00 : f32
      %25 = vector.broadcast %cst_20 : f32 to vector<16x128xf32>
      %26 = arith.subf %25, %24 : vector<16x128xf32>
      %27 = math.exp %26 : vector<16x128xf32>
      %cst_21 = arith.constant 1.000000e+00 : f32
      %28 = vector.broadcast %cst_21 : f32 to vector<16x128xf32>
      %29 = arith.addf %28, %27 : vector<16x128xf32>
      %30 = tpu.reciprocal %29 {approx = true} : vector<16x128xf32> -> vector<16x128xf32>
      %c0_22 = arith.constant 0 : index
      %c0_23 = arith.constant 0 : index
      %31 = vector.load %arg7[%c0_22, %c0_23] : memref<16x128xf32, #tpu.memory_space<vmem>>, vector<16x128xf32>
      tpu.vector_store %arg7[%c0_22, %c0_23], %30 {strides = array<i32>} : memref<16x128xf32, #tpu.memory_space<vmem>>, vector<16x128xf32>,
    } else {
    }
    return
  }
  func.func @transform_0(%arg0: i32, %arg1: i32) -> (i32, i32) {
    %c0_i32 = arith.constant 0 : i32
    %c0_i32_0 = arith.constant 0 : i32
    return %arg0, %c0_i32 : i32, i32
  }
  func.func @transform_1(%arg0: i32, %arg1: i32) -> (i32, i32) {
    %c0_i32 = arith.constant 0 : i32
    %c0_i32_0 = arith.constant 0 : i32
    return %c0_i32, %arg1 : i32, i32
  }
  func.func @transform_2(%arg0: i32, %arg1: i32) -> (i32, i32) {
    %c0_i32 = arith.constant 0 : i32
    %c0_i32_0 = arith.constant 0 : i32
    return %c0_i32, %arg1 : i32, i32
  }
  func.func @transform_3(%arg0: i32, %arg1: i32) -> (i32, i32) {
    %c0_i32 = arith.constant 0 : i32
    %c0_i32_0 = arith.constant 0 : i32
    return %arg1, %c0_i32 : i32, i32
  }
  func.func @transform_4(%arg0: i32, %arg1: i32) -> (i32, i32) {
    %c0_i32 = arith.constant 0 : i32
    %c0_i32_0 = arith.constant 0 : i32
    %c0_i32_1 = arith.constant 0 : i32
    return %c0_i32, %c0_i32_0 : i32, i32
  }
  func.func @transform_5(%arg0: i32, %arg1: i32) -> (i32, i32) {
    %c0_i32 = arith.constant 0 : i32
    %c0_i32_0 = arith.constant 0 : i32
    return %arg0, %c0_i32 : i32, i32
  }
}

module attributes {stable_mosaic.version = 11 : i64} {
  func.func @fc_decoder_kernel(%arg0: i32, %arg1: i32, %arg2: memref<16x128xf32, #tpu.memory_space<vmem>>, %arg3: memref<128x128xbf16, #tpu.memory_space<vmem>>, %arg4: memref<1x128xf32, #tpu.memory_space<vmem>>, %arg5: memref<128x128xbf16, #tpu.memory_space<vmem>>, %arg6: memref<1x128xf32, #tpu.memory_space<vmem>>, %arg7: memref<16x128xf32, #tpu.memory_space<vmem>>, %arg8: memref<16x128xf32, #tpu.memory_space<vmem>>) attributes {dimension_semantics = [#tpu.dimension_semantics<parallel>, #tpu.dimension_semantics<arbitrary>], iteration_bounds = array<i64: 1, 1>, scalar_prefetch = 0 : i64, scratch_operands = 1 : i64, tpu.core_type = #tpu.core_type<tc>, window_params = [{transform_indices = @transform_0, window_bounds = array<i64: 16, 128>}, {transform_indices = @transform_1, window_bounds = array<i64: 128, 128>}, {transform_indices = @transform_2, window_bounds = array<i64: 1, 128>}, {transform_indices = @transform_3, window_bounds = array<i64: 128, 128>}, {pipeline_mode = #tpu.pipeline_mode<synchronous>, transform_indices = @transform_4, window_bounds = array<i64: 1, 128>}, {transform_indices = @transform_5, window_bounds = array<i64: 16, 128>}]} {
    %c0_i32 = arith.constant 0 : i32
    %0 = arith.cmpi eq, %arg1, %c0_i32 : i32
    %1 = arith.extui %0 : i1 to i32
    %c0_i32_0 = arith.constant 0 : i32
    %2 = arith.cmpi ne, %1, %c0_i32_0 : i32
    scf.if %2 {
      %cst_16 = arith.constant 0.000000e+00 : f32
      %21 = vector.broadcast %cst_16 : f32 to vector<16x128xf32>
      %c0_17 = arith.constant 0 : index
      %c0_18 = arith.constant 0 : index
      %22 = vector.load %arg8[%c0_17, %c0_18] : memref<16x128xf32, #tpu.memory_space<vmem>>, vector<16x128xf32>
      tpu.vector_store %arg8[%c0_17, %c0_18], %21 {strides = array<i32>} : memref<16x128xf32, #tpu.memory_space<vmem>>, vector<16x128xf32>,
    } else {
    }
    %c0 = arith.constant 0 : index
    %c0_1 = arith.constant 0 : index
    %3 = vector.load %arg2[%c0, %c0_1] : memref<16x128xf32, #tpu.memory_space<vmem>>, vector<16x128xf32>
    %4 = arith.truncf %3 : vector<16x128xf32> to vector<16x128xbf16>
    %c0_2 = arith.constant 0 : index
    %c0_3 = arith.constant 0 : index
    %5 = vector.load %arg3[%c0_2, %c0_3] : memref<128x128xbf16, #tpu.memory_space<vmem>>, vector<128x128xbf16>
    %cst = arith.constant dense<0.000000e+00> : vector<16x128xf32>
    %6 = tpu.matmul %4, %5, %cst {dimension_numbers = #tpu.dot_dimension_numbers<[1], [0], [0], [1], [0, 0, 1, 1], [], []>} : vector<16x128xbf16>, vector<128x128xbf16>, vector<16x128xf32> -> vector<16x128xf32>
    %c0_4 = arith.constant 0 : index
    %c0_5 = arith.constant 0 : index
    %7 = vector.load %arg4[%c0_4, %c0_5] : memref<1x128xf32, #tpu.memory_space<vmem>>, vector<1x128xf32>
    %8 = vector.broadcast %7 : vector<1x128xf32> to vector<16x128xf32>
    %9 = arith.addf %6, %8 : vector<16x128xf32>
    %cst_6 = arith.constant 0.000000e+00 : f32
    %10 = vector.broadcast %cst_6 : f32 to vector<16x128xf32>
    %11 = arith.maximumf %9, %10 : vector<16x128xf32>
    %c0_7 = arith.constant 0 : index
    %c0_8 = arith.constant 0 : index
    %12 = vector.load %arg8[%c0_7, %c0_8] : memref<16x128xf32, #tpu.memory_space<vmem>>, vector<16x128xf32>
    %13 = arith.truncf %11 : vector<16x128xf32> to vector<16x128xbf16>
    %c0_9 = arith.constant 0 : index
    %c0_10 = arith.constant 0 : index
    %14 = vector.load %arg5[%c0_9, %c0_10] : memref<128x128xbf16, #tpu.memory_space<vmem>>, vector<128x128xbf16>
    %cst_11 = arith.constant dense<0.000000e+00> : vector<16x128xf32>
    %15 = tpu.matmul %13, %14, %cst_11 {dimension_numbers = #tpu.dot_dimension_numbers<[1], [0], [0], [1], [0, 0, 1, 1], [], []>} : vector<16x128xbf16>, vector<128x128xbf16>, vector<16x128xf32> -> vector<16x128xf32>
    %16 = arith.addf %12, %15 : vector<16x128xf32>
    %c0_12 = arith.constant 0 : index
    %c0_13 = arith.constant 0 : index
    %17 = vector.load %arg8[%c0_12, %c0_13] : memref<16x128xf32, #tpu.memory_space<vmem>>, vector<16x128xf32>
    tpu.vector_store %arg8[%c0_12, %c0_13], %16 {strides = array<i32>} : memref<16x128xf32, #tpu.memory_space<vmem>>, vector<16x128xf32>,
    %c0_i32_14 = arith.constant 0 : i32
    %18 = arith.cmpi eq, %arg1, %c0_i32_14 : i32
    %19 = arith.extui %18 : i1 to i32
    %c0_i32_15 = arith.constant 0 : i32
    %20 = arith.cmpi ne, %19, %c0_i32_15 : i32
    scf.if %20 {
      %c0_16 = arith.constant 0 : index
      %c0_17 = arith.constant 0 : index
      %21 = vector.load %arg8[%c0_16, %c0_17] : memref<16x128xf32, #tpu.memory_space<vmem>>, vector<16x128xf32>
      %c0_18 = arith.constant 0 : index
      %c0_19 = arith.constant 0 : index
      %22 = vector.load %arg6[%c0_18, %c0_19] : memref<1x128xf32, #tpu.memory_space<vmem>>, vector<1x128xf32>
      %23 = vector.broadcast %22 : vector<1x128xf32> to vector<16x128xf32>
      %24 = arith.addf %21, %23 : vector<16x128xf32>
      %cst_20 = arith.constant 0.000000e+00 : f32
      %25 = vector.broadcast %cst_20 : f32 to vector<16x128xf32>
      %26 = arith.subf %25, %24 : vector<16x128xf32>
      %27 = math.exp %26 : vector<16x128xf32>
      %cst_21 = arith.constant 1.000000e+00 : f32
      %28 = vector.broadcast %cst_21 : f32 to vector<16x128xf32>
      %29 = arith.addf %28, %27 : vector<16x128xf32>
      %30 = tpu.reciprocal %29 {approx = true} : vector<16x128xf32> -> vector<16x128xf32>
      %c0_22 = arith.constant 0 : index
      %c0_23 = arith.constant 0 : index
      %31 = vector.load %arg7[%c0_22, %c0_23] : memref<16x128xf32, #tpu.memory_space<vmem>>, vector<16x128xf32>
      tpu.vector_store %arg7[%c0_22, %c0_23], %30 {strides = array<i32>} : memref<16x128xf32, #tpu.memory_space<vmem>>, vector<16x128xf32>,
    } else {
    }
    return
  }
  func.func @transform_0(%arg0: i32, %arg1: i32) -> (i32, i32) {
    %c0_i32 = arith.constant 0 : i32
    %c0_i32_0 = arith.constant 0 : i32
    return %arg0, %c0_i32 : i32, i32
  }
  func.func @transform_1(%arg0: i32, %arg1: i32) -> (i32, i32) {
    %c0_i32 = arith.constant 0 : i32
    %c0_i32_0 = arith.constant 0 : i32
    return %c0_i32, %arg1 : i32, i32
  }
  func.func @transform_2(%arg0: i32, %arg1: i32) -> (i32, i32) {
    %c0_i32 = arith.constant 0 : i32
    %c0_i32_0 = arith.constant 0 : i32
    return %c0_i32, %arg1 : i32, i32
  }
  func.func @transform_3(%arg0: i32, %arg1: i32) -> (i32, i32) {
    %c0_i32 = arith.constant 0 : i32
    %c0_i32_0 = arith.constant 0 : i32
    return %arg1, %c0_i32 : i32, i32
  }
  func.func @transform_4(%arg0: i32, %arg1: i32) -> (i32, i32) {
    %c0_i32 = arith.constant 0 : i32
    %c0_i32_0 = arith.constant 0 : i32
    %c0_i32_1 = arith.constant 0 : i32
    return %c0_i32, %c0_i32_0 : i32, i32
  }
  func.func @transform_5(%arg0: i32, %arg1: i32) -> (i32, i32) {
    %c0_i32 = arith.constant 0 : i32
    %c0_i32_0 = arith.constant 0 : i32
    return %arg0, %c0_i32 : i32, i32
  }
}

</mosaic_0001>

<llo_original>
// kernel: tpu_custom_call.1
$region0: #{tpu_custom_call.1}
  #allocation0 [shape = 'u32[]', space=smem, size = 0x4, offset = 0x4, fixed_abs, tag = 'smem constant byte address 0x4 - core index']
  #allocation1 [shape = 'u32[144,128]{1,0:T(1,128)}', space=vmem, size = 0x12000, scoped, tag = 'internal scratch']
  #allocation2 [shape = 'f32[16,128]{1,0:T(8,128)}', space=vmem, size = 0x2000, scoped, tag = 'scratch operand']
  %s0 = inlined_call_operand.hbm [shape: f32[16,128], index: 0, kind: input, shape index: {}]
  %s1 = inlined_call_operand.hbm [shape: bf16[128,128], index: 1, kind: input, shape index: {}]
  %s2 = inlined_call_operand.vmem [shape: f32[1,128], index: 2, kind: input, shape index: {}]
  %s3 = inlined_call_operand.hbm [shape: bf16[128,128], index: 3, kind: input, shape index: {}]
  %s4 = inlined_call_operand.vmem [shape: f32[1,128], index: 4, kind: input, shape index: {}]
  %s5 = inlined_call_operand.hbm [shape: f32[16,128], index: 5, kind: output, shape index: {}]
  %s6 = sld [smem:[#allocation0]]
  $region50: #{tpu_custom_call.1} parent=0
    _
  %s8 = ssub.s32 1, %s6
  %s9 = scalar_select 0, %s8, %s6
  $region1: #{tpu_custom_call.1} parent=0
    #allocation3 [shape = 'u8[8192]{0}', space=vmem, size = 0x2000, scoped, tag = 'input window, operand 0, single buffered']
    #allocation4 [shape = 's32[1]{0}', space=sflag, size = 0x4, scoped, tag = 'scoped memory for tpu_custom_call.1']
    #allocation5 [shape = 's32[1]{0}', space=sflag, size = 0x4, scoped, tag = 'scoped memory for tpu_custom_call.1']
    #allocation6 [shape = 'u8[32768]{0}', space=vmem, size = 0x8000, scoped, tag = 'input window, operand 1, single buffered']
    #allocation7 [shape = 's32[1]{0}', space=sflag, size = 0x4, scoped, tag = 'scoped memory for tpu_custom_call.1']
    #allocation8 [shape = 'u8[32768]{0}', space=vmem, size = 0x8000, scoped, tag = 'input window, operand 3, single buffered']
    #allocation9 [shape = 'u8[8192]{0}', space=vmem, size = 0x2000, scoped, tag = 'output window, operand 0, single buffered']
    %10 = vsyncpa [#allocation4], 0
    %11 = vsyncpa [#allocation7], 0
    %12 = vsyncpa [#allocation5], 0
    // Predicated region
    $region2: #{tpu_custom_call.1} parent=1 // pred_check
      _
    $region3: #{tpu_custom_call.1} parent=1 // pred_check_branch
      %14 = sbr.rel (0) target = $region5
    $region4: #{tpu_custom_call.1} parent=1 // pred_region
      %s16 = ssub.s32 256, 256
      %17 = vsyncadd [#allocation4], %s16
      %s18 = sshll.u32 [#allocation3], 4
      %s19 = int_to_ptr.vmem [resolvable:$true] %s18
      %24 = dma.hbm_to_vmem [thread:$0]  %s0, 256, %s19, [#allocation4], 128, 128, 8
    $region5: #{tpu_custom_call.1} parent=1 // pred_fallthru
      _
    // Predicated region
    $region6: #{tpu_custom_call.1} parent=1 // pred_check
      _
    $region7: #{tpu_custom_call.1} parent=1 // pred_check_branch
      %26 = sbr.rel (0) target = $region9
    $region8: #{tpu_custom_call.1} parent=1 // pred_region
      %s28 = ssub.s32 1024, 1024
      %29 = vsyncadd [#allocation7], %s28
      %s30 = sshll.u32 [#allocation6], 4
      %s31 = int_to_ptr.vmem [resolvable:$true] %s30
      %36 = dma.hbm_to_vmem [thread:$0]  %s1, 1024, %s31, [#allocation7], 64, 64, 4
    $region9: #{tpu_custom_call.1} parent=1 // pred_fallthru
      _
    // Predicated region
    $region10: #{tpu_custom_call.1} parent=1 // pred_check
      _
    $region11: #{tpu_custom_call.1} parent=1 // pred_check_branch
      %38 = sbr.rel (0) target = $region13
    $region12: #{tpu_custom_call.1} parent=1 // pred_region
      _
    $region13: #{tpu_custom_call.1} parent=1 // pred_fallthru
      _
    // Predicated region
    $region14: #{tpu_custom_call.1} parent=1 // pred_check
      _
    $region15: #{tpu_custom_call.1} parent=1 // pred_check_branch
      %40 = sbr.rel (0) target = $region17
    $region16: #{tpu_custom_call.1} parent=1 // pred_region
      %s42 = ssub.s32 1024, 1024
      %43 = vsyncadd [#allocation7], %s42
      %s44 = sshll.u32 [#allocation8], 4
      %s45 = int_to_ptr.vmem [resolvable:$true] %s44
      %50 = dma.hbm_to_vmem [thread:$0]  %s3, 1024, %s45, [#allocation7], 64, 64, 4
    $region17: #{tpu_custom_call.1} parent=1 // pred_fallthru
      _
    // Predicated region
    $region18: #{tpu_custom_call.1} parent=1 // pred_check
      _
    $region19: #{tpu_custom_call.1} parent=1 // pred_check_branch
      %52 = sbr.rel (0) target = $region21
    $region20: #{tpu_custom_call.1} parent=1 // pred_region
      _
    $region21: #{tpu_custom_call.1} parent=1 // pred_fallthru
      _
    // Predicated region
    $region22: #{tpu_custom_call.1} parent=1 // pred_check
      _
    $region23: #{tpu_custom_call.1} parent=1 // pred_check_branch
      %54 = sbr.rel (0) target = $region25
    $region24: #{tpu_custom_call.1} parent=1 // pred_region
      %55 = dma.done [#allocation4], 256
    $region25: #{tpu_custom_call.1} parent=1 // pred_fallthru
      _
    // Predicated region
    $region26: #{tpu_custom_call.1} parent=1 // pred_check
      _
    $region27: #{tpu_custom_call.1} parent=1 // pred_check_branch
      %57 = sbr.rel (0) target = $region29
    $region28: #{tpu_custom_call.1} parent=1 // pred_region
      %58 = dma.done [#allocation7], 1024
    $region29: #{tpu_custom_call.1} parent=1 // pred_fallthru
      _
    // Predicated region
    $region30: #{tpu_custom_call.1} parent=1 // pred_check
      _
    $region31: #{tpu_custom_call.1} parent=1 // pred_check_branch
      %60 = sbr.rel (0) target = $region33
    $region32: #{tpu_custom_call.1} parent=1 // pred_region
      %61 = dma.done [#allocation7], 1024
    $region33: #{tpu_custom_call.1} parent=1 // pred_fallthru
      _
    %p63 = scmp.eq.s32.totalorder 0, 0
    // Predicated region
    $region34: #{tpu_custom_call.1} parent=1 // pred_check
      %p64 = pneg %p63
    $region35: #{tpu_custom_call.1} parent=1 // pred_check_branch
      %66 = sbr.rel (%p64) target = $region37
    $region36: #{tpu_custom_call.1} parent=1 // pred_region
      %67 = vst [vmem:[#allocation2] sm:$0xff] 0.0
      %68 = vst [vmem:[#allocation2 + $0x8] sm:$0xff] 0.0
    $region37: #{tpu_custom_call.1} parent=1 // pred_fallthru
      _
    %v69 = vld [vmem:[#allocation3] sm:$0xff]
    %v70 = vld [vmem:[#allocation3 + $0x8] sm:$0xff]
    %v71 = vpack.c.bf16 %v70, %v69
    %v72 = vld [vmem:[#allocation6] sm:$0xf]
    %v73 = vld [vmem:[#allocation6 + $0x4] sm:$0xf]
    %v74 = vld [vmem:[#allocation6 + $0x8] sm:$0xf]
    %v75 = vld [vmem:[#allocation6 + $0xc] sm:$0xf]
    %v76 = vld [vmem:[#allocation6 + $0x10] sm:$0xf]
    %v77 = vld [vmem:[#allocation6 + $0x14] sm:$0xf]
    %v78 = vld [vmem:[#allocation6 + $0x18] sm:$0xf]
    %v79 = vld [vmem:[#allocation6 + $0x1c] sm:$0xf]
    %v80 = vld [vmem:[#allocation6 + $0x20] sm:$0xf]
    %v81 = vld [vmem:[#allocation6 + $0x24] sm:$0xf]
    %v82 = vld [vmem:[#allocation6 + $0x28] sm:$0xf]
    %v83 = vld [vmem:[#allocation6 + $0x2c] sm:$0xf]
    %v84 = vld [vmem:[#allocation6 + $0x30] sm:$0xf]
    %v85 = vld [vmem:[#allocation6 + $0x34] sm:$0xf]
    %v86 = vld [vmem:[#allocation6 + $0x38] sm:$0xf]
    %v87 = vld [vmem:[#allocation6 + $0x3c] sm:$0xf]
    %v88 = vld [vmem:[%s2] sm:$0x1]
    %v90 = vlaneseq
    %v91 = vshrl.u32 %v90, 7
    %v92 = vsub.s32 0, %v91
    %v93 = vrot.slane %v88, %v92
    %v111 = vunpack.c.l.b16 %v72
    %v112 = vunpack.c.l.b16 %v73
    %v113 = vunpack.c.l.b16 %v74
    %v114 = vunpack.c.l.b16 %v75
    %v115 = vunpack.c.l.b16 %v76
    %v116 = vunpack.c.l.b16 %v77
    %v117 = vunpack.c.l.b16 %v78
    %v118 = vunpack.c.l.b16 %v79
    %v119 = vunpack.c.l.b16 %v80
    %v120 = vunpack.c.l.b16 %v81
    %v121 = vunpack.c.l.b16 %v82
    %v122 = vunpack.c.l.b16 %v83
    %v123 = vunpack.c.l.b16 %v84
    %v124 = vunpack.c.l.b16 %v85
    %v125 = vunpack.c.l.b16 %v86
    %v126 = vunpack.c.l.b16 %v87
    %v127 = vpack.c.b16 %v112, %v111
    %v128 = vpack.c.b16 %v114, %v113
    %v129 = vpack.c.b16 %v116, %v115
    %v130 = vpack.c.b16 %v118, %v117
    %v131 = vpack.c.b16 %v120, %v119
    %v132 = vpack.c.b16 %v122, %v121
    %v133 = vpack.c.b16 %v124, %v123
    %v134 = vpack.c.b16 %v126, %v125
    %143 = vmatprep.subr.bf16.mxu0 0
    %144 = vmatpush1.bf16.msra.mxu0 %v127
    %145 = vmatprep.subr.bf16.mxu0 0
    %146 = vmatpush1.bf16.msra.mxu0 %v128
    %147 = vmatprep.subr.bf16.mxu0 0
    %148 = vmatpush1.bf16.msra.mxu0 %v129
    %149 = vmatprep.subr.bf16.mxu0 0
    %150 = vmatpush1.bf16.msra.mxu0 %v130
    %151 = vmatprep.subr.bf16.mxu0 0
    %152 = vmatpush1.bf16.msra.mxu0 %v131
    %153 = vmatprep.subr.bf16.mxu0 0
    %154 = vmatpush1.bf16.msra.mxu0 %v132
    %155 = vmatprep.subr.bf16.mxu0 0
    %156 = vmatpush1.bf16.msra.mxu0 %v133
    %157 = vmatprep.subr.bf16.mxu0 0
    %158 = vmatpush1.bf16.msra.mxu0 %v134
    %159 = vmatprep.subr.bf16.mxu0 0
    %160 = vmatpush1.bf16.msra.mxu0 0
    %161 = vmatprep.subr.bf16.mxu0 0
    %162 = vmatpush1.bf16.msra.mxu0 0
    %163 = vmatprep.subr.bf16.mxu0 0
    %164 = vmatpush1.bf16.msra.mxu0 0
    %165 = vmatprep.subr.bf16.mxu0 0
    %166 = vmatpush1.bf16.msra.mxu0 0
    %167 = vmatprep.subr.bf16.mxu0 0
    %168 = vmatpush1.bf16.msra.mxu0 0
    %169 = vmatprep.subr.bf16.mxu0 0
    %170 = vmatpush1.bf16.msra.mxu0 0
    %171 = vmatprep.subr.bf16.mxu0 0
    %172 = vmatpush1.bf16.msra.mxu0 0
    %173 = vmatprep.subr.bf16.mxu0 0
    %174 = vmatpush1.bf16.msra.mxu0 0
    %175 = vmatprep.mubr.bf16.mxu0 0
    %176 = vmatmul.mubr.bf16.gmra.mrb[0].mxu0 %v71
    %v177 = vpop.f32.mrb[0].mxu0
    %v178 = vadd.f32 %v93, %v177
    %v179 = vpop.f32.mrb[0].mxu0
    %v180 = vpop.f32.mrb[0].mxu0
    %v181 = vadd.f32 %v93, %v180
    %v182 = vpop.f32.mrb[0].mxu0
    %183 = vdwg.mxu0
    %v184 = vmax.f32 %v178, 0.0
    %v185 = vmax.f32 %v181, 0.0
    %v186 = vld [vmem:[#allocation2] sm:$0xff]
    %v187 = vld [vmem:[#allocation2 + $0x8] sm:$0xff]
    %v188 = vpack.c.bf16 %v185, %v184
    %v189 = vld [vmem:[#allocation8] sm:$0xf]
    %v190 = vld [vmem:[#allocation8 + $0x4] sm:$0xf]
    %v191 = vld [vmem:[#allocation8 + $0x8] sm:$0xf]
    %v192 = vld [vmem:[#allocation8 + $0xc] sm:$0xf]
    %v193 = vld [vmem:[#allocation8 + $0x10] sm:$0xf]
    %v194 = vld [vmem:[#allocation8 + $0x14] sm:$0xf]
    %v195 = vld [vmem:[#allocation8 + $0x18] sm:$0xf]
    %v196 = vld [vmem:[#allocation8 + $0x1c] sm:$0xf]
    %v197 = vld [vmem:[#allocation8 + $0x20] sm:$0xf]
    %v198 = vld [vmem:[#allocation8 + $0x24] sm:$0xf]
    %v199 = vld [vmem:[#allocation8 + $0x28] sm:$0xf]
    %v200 = vld [vmem:[#allocation8 + $0x2c] sm:$0xf]
    %v201 = vld [vmem:[#allocation8 + $0x30] sm:$0xf]
    %v202 = vld [vmem:[#allocation8 + $0x34] sm:$0xf]
    %v203 = vld [vmem:[#allocation8 + $0x38] sm:$0xf]
    %v204 = vld [vmem:[#allocation8 + $0x3c] sm:$0xf]
    %v221 = vunpack.c.l.b16 %v189
    %v222 = vunpack.c.l.b16 %v190
    %v223 = vunpack.c.l.b16 %v191
    %v224 = vunpack.c.l.b16 %v192
    %v225 = vunpack.c.l.b16 %v193
    %v226 = vunpack.c.l.b16 %v194
    %v227 = vunpack.c.l.b16 %v195
    %v228 = vunpack.c.l.b16 %v196
    %v229 = vunpack.c.l.b16 %v197
    %v230 = vunpack.c.l.b16 %v198
    %v231 = vunpack.c.l.b16 %v199
    %v232 = vunpack.c.l.b16 %v200
    %v233 = vunpack.c.l.b16 %v201
    %v234 = vunpack.c.l.b16 %v202
    %v235 = vunpack.c.l.b16 %v203
    %v236 = vunpack.c.l.b16 %v204
    %v237 = vpack.c.b16 %v222, %v221
    %v238 = vpack.c.b16 %v224, %v223
    %v239 = vpack.c.b16 %v226, %v225
    %v240 = vpack.c.b16 %v228, %v227
    %v241 = vpack.c.b16 %v230, %v229
    %v242 = vpack.c.b16 %v232, %v231
    %v243 = vpack.c.b16 %v234, %v233
    %v244 = vpack.c.b16 %v236, %v235
    %253 = vmatprep.subr.bf16.mxu0 0
    %254 = vmatpush1.bf16.msra.mxu0 %v237
    %255 = vmatprep.subr.bf16.mxu0 0
    %256 = vmatpush1.bf16.msra.mxu0 %v238
    %257 = vmatprep.subr.bf16.mxu0 0
    %258 = vmatpush1.bf16.msra.mxu0 %v239
    %259 = vmatprep.subr.bf16.mxu0 0
    %260 = vmatpush1.bf16.msra.mxu0 %v240
    %261 = vmatprep.subr.bf16.mxu0 0
    %262 = vmatpush1.bf16.msra.mxu0 %v241
    %263 = vmatprep.subr.bf16.mxu0 0
    %264 = vmatpush1.bf16.msra.mxu0 %v242
    %265 = vmatprep.subr.bf16.mxu0 0
    %266 = vmatpush1.bf16.msra.mxu0 %v243
    %267 = vmatprep.subr.bf16.mxu0 0
    %268 = vmatpush1.bf16.msra.mxu0 %v244
    %269 = vmatprep.subr.bf16.mxu0 0
    %270 = vmatpush1.bf16.msra.mxu0 0
    %271 = vmatprep.subr.bf16.mxu0 0
    %272 = vmatpush1.bf16.msra.mxu0 0
    %273 = vmatprep.subr.bf16.mxu0 0
    %274 = vmatpush1.bf16.msra.mxu0 0
    %275 = vmatprep.subr.bf16.mxu0 0
    %276 = vmatpush1.bf16.msra.mxu0 0
    %277 = vmatprep.subr.bf16.mxu0 0
    %278 = vmatpush1.bf16.msra.mxu0 0
    %279 = vmatprep.subr.bf16.mxu0 0
    %280 = vmatpush1.bf16.msra.mxu0 0
    %281 = vmatprep.subr.bf16.mxu0 0
    %282 = vmatpush1.bf16.msra.mxu0 0
    %283 = vmatprep.subr.bf16.mxu0 0
    %284 = vmatpush1.bf16.msra.mxu0 0
    %285 = vmatprep.mubr.bf16.mxu0 0
    %286 = vmatmul.mubr.bf16.gmra.mrb[0].mxu0 %v188
    %v287 = vpop.f32.mrb[0].mxu0
    %v288 = vadd.f32 0.0, %v287
    %v289 = vpop.f32.mrb[0].mxu0
    %v290 = vpop.f32.mrb[0].mxu0
    %v291 = vadd.f32 0.0, %v290
    %v292 = vpop.f32.mrb[0].mxu0
    %293 = vdwg.mxu0
    %v294 = vadd.f32 %v186, %v288
    %v295 = vadd.f32 %v187, %v291
    %296 = vst [vmem:[#allocation2] sm:$0xff] %v294
    %297 = vst [vmem:[#allocation2 + $0x8] sm:$0xff] %v295
    // Predicated region
    $region38: #{tpu_custom_call.1} parent=1 // pred_check
      %p298 = pneg %p63
    $region39: #{tpu_custom_call.1} parent=1 // pred_check_branch
      %300 = sbr.rel (%p298) target = $region41
    $region40: #{tpu_custom_call.1} parent=1 // pred_region
      %v301 = vld [vmem:[#allocation2] sm:$0xff]
      %v302 = vld [vmem:[#allocation2 + $0x8] sm:$0xff]
      %v303 = vld [vmem:[%s4] sm:$0x1]
      %v305 = vlaneseq
      %v306 = vshrl.u32 %v305, 7
      %v307 = vsub.s32 0, %v306
      %v308 = vrot.slane %v303, %v307
      %v310 = vadd.f32 %v301, %v308
      %v311 = vadd.f32 %v302, %v308
      %v312 = vsub.f32 0.0, %v310
      %v313 = vsub.f32 0.0, %v311
      %v314 = vmul.f32 %v312, 1.442695
      %v315 = vpow.pop %v314
      %v316 = vmul.f32 %v313, 1.442695
      %v317 = vpow.pop %v316
      %v318 = vadd.f32 %v315, 1.0
      %v319 = vadd.f32 %v317, 1.0
      %v320 = vrcp.pop %v318
      %v321 = vrcp.pop %v319
      %322 = vst [vmem:[#allocation9] sm:$0xff] %v320
      %323 = vst [vmem:[#allocation9 + $0x8] sm:$0xff] %v321
    $region41: #{tpu_custom_call.1} parent=1 // pred_fallthru
      _
    // Predicated region
    $region42: #{tpu_custom_call.1} parent=1 // pred_check
      _
    $region43: #{tpu_custom_call.1} parent=1 // pred_check_branch
      %325 = sbr.rel (0) target = $region45
    $region44: #{tpu_custom_call.1} parent=1 // pred_region
      %s327 = ssub.s32 256, 256
      %328 = vsyncadd [#allocation5], %s327
      %s329 = sshll.u32 [#allocation9], 4
      %s330 = int_to_ptr.vmem [resolvable:$true] %s329
      %335 = dma.vmem_to_hbm [thread:$0]  %s330, 256, %s5, [#allocation5], 128, 128, 8
    $region45: #{tpu_custom_call.1} parent=1 // pred_fallthru
      _
    // Predicated region
    $region46: #{tpu_custom_call.1} parent=1 // pred_check
      _
    $region47: #{tpu_custom_call.1} parent=1 // pred_check_branch
      %337 = sbr.rel (0) target = $region49
    $region48: #{tpu_custom_call.1} parent=1 // pred_region
      %338 = dma.done [#allocation5], 256
    $region49: #{tpu_custom_call.1} parent=1 // pred_fallthru
      _
    %339 = vsyncpa [#allocation4], 1
    %340 = vsyncpa [#allocation7], 1
    %341 = vsyncpa [#allocation5], 1

// kernel: tpu_custom_call.1
$region0: #{tpu_custom_call.1}
  #allocation0 [shape = 'u32[]', space=smem, size = 0x4, offset = 0x4, fixed_abs, tag = 'smem constant byte address 0x4 - core index']
  #allocation1 [shape = 'u32[144,128]{1,0:T(1,128)}', space=vmem, size = 0x12000, scoped, tag = 'internal scratch']
  #allocation2 [shape = 'f32[16,128]{1,0:T(8,128)}', space=vmem, size = 0x2000, scoped, tag = 'scratch operand']
  %s0 = inlined_call_operand.hbm [shape: f32[16,128], index: 0, kind: input, shape index: {}]
  %s1 = inlined_call_operand.hbm [shape: bf16[128,128], index: 1, kind: input, shape index: {}]
  %s2 = inlined_call_operand.vmem [shape: f32[1,128], index: 2, kind: input, shape index: {}]
  %s3 = inlined_call_operand.hbm [shape: bf16[128,128], index: 3, kind: input, shape index: {}]
  %s4 = inlined_call_operand.vmem [shape: f32[1,128], index: 4, kind: input, shape index: {}]
  %s5 = inlined_call_operand.hbm [shape: f32[16,128], index: 5, kind: output, shape index: {}]
  %s6 = sld [smem:[#allocation0]]
  $region50: #{tpu_custom_call.1} parent=0
    _
  %s8 = ssub.s32 1, %s6
  %s9 = scalar_select 0, %s8, %s6
  $region1: #{tpu_custom_call.1} parent=0
    #allocation3 [shape = 'u8[8192]{0}', space=vmem, size = 0x2000, scoped, tag = 'input window, operand 0, single buffered']
    #allocation4 [shape = 's32[1]{0}', space=sflag, size = 0x4, scoped, tag = 'scoped memory for tpu_custom_call.1']
    #allocation5 [shape = 's32[1]{0}', space=sflag, size = 0x4, scoped, tag = 'scoped memory for tpu_custom_call.1']
    #allocation6 [shape = 'u8[32768]{0}', space=vmem, size = 0x8000, scoped, tag = 'input window, operand 1, single buffered']
    #allocation7 [shape = 's32[1]{0}', space=sflag, size = 0x4, scoped, tag = 'scoped memory for tpu_custom_call.1']
    #allocation8 [shape = 'u8[32768]{0}', space=vmem, size = 0x8000, scoped, tag = 'input window, operand 3, single buffered']
    #allocation9 [shape = 'u8[8192]{0}', space=vmem, size = 0x2000, scoped, tag = 'output window, operand 0, single buffered']
    %10 = vsyncpa [#allocation4], 0
    %11 = vsyncpa [#allocation7], 0
    %12 = vsyncpa [#allocation5], 0
    // Predicated region
    $region2: #{tpu_custom_call.1} parent=1 // pred_check
      _
    $region3: #{tpu_custom_call.1} parent=1 // pred_check_branch
      %14 = sbr.rel (0) target = $region5
    $region4: #{tpu_custom_call.1} parent=1 // pred_region
      %s16 = ssub.s32 256, 256
      %17 = vsyncadd [#allocation4], %s16
      %s18 = sshll.u32 [#allocation3], 4
      %s19 = int_to_ptr.vmem [resolvable:$true] %s18
      %24 = dma.hbm_to_vmem [thread:$0]  %s0, 256, %s19, [#allocation4], 128, 128, 8
    $region5: #{tpu_custom_call.1} parent=1 // pred_fallthru
      _
    // Predicated region
    $region6: #{tpu_custom_call.1} parent=1 // pred_check
      _
    $region7: #{tpu_custom_call.1} parent=1 // pred_check_branch
      %26 = sbr.rel (0) target = $region9
    $region8: #{tpu_custom_call.1} parent=1 // pred_region
      %s28 = ssub.s32 1024, 1024
      %29 = vsyncadd [#allocation7], %s28
      %s30 = sshll.u32 [#allocation6], 4
      %s31 = int_to_ptr.vmem [resolvable:$true] %s30
      %36 = dma.hbm_to_vmem [thread:$0]  %s1, 1024, %s31, [#allocation7], 64, 64, 4
    $region9: #{tpu_custom_call.1} parent=1 // pred_fallthru
      _
    // Predicated region
    $region10: #{tpu_custom_call.1} parent=1 // pred_check
      _
    $region11: #{tpu_custom_call.1} parent=1 // pred_check_branch
      %38 = sbr.rel (0) target = $region13
    $region12: #{tpu_custom_call.1} parent=1 // pred_region
      _
    $region13: #{tpu_custom_call.1} parent=1 // pred_fallthru
      _
    // Predicated region
    $region14: #{tpu_custom_call.1} parent=1 // pred_check
      _
    $region15: #{tpu_custom_call.1} parent=1 // pred_check_branch
      %40 = sbr.rel (0) target = $region17
    $region16: #{tpu_custom_call.1} parent=1 // pred_region
      %s42 = ssub.s32 1024, 1024
      %43 = vsyncadd [#allocation7], %s42
      %s44 = sshll.u32 [#allocation8], 4
      %s45 = int_to_ptr.vmem [resolvable:$true] %s44
      %50 = dma.hbm_to_vmem [thread:$0]  %s3, 1024, %s45, [#allocation7], 64, 64, 4
    $region17: #{tpu_custom_call.1} parent=1 // pred_fallthru
      _
    // Predicated region
    $region18: #{tpu_custom_call.1} parent=1 // pred_check
      _
    $region19: #{tpu_custom_call.1} parent=1 // pred_check_branch
      %52 = sbr.rel (0) target = $region21
    $region20: #{tpu_custom_call.1} parent=1 // pred_region
      _
    $region21: #{tpu_custom_call.1} parent=1 // pred_fallthru
      _
    // Predicated region
    $region22: #{tpu_custom_call.1} parent=1 // pred_check
      _
    $region23: #{tpu_custom_call.1} parent=1 // pred_check_branch
      %54 = sbr.rel (0) target = $region25
    $region24: #{tpu_custom_call.1} parent=1 // pred_region
      %55 = dma.done [#allocation4], 256
    $region25: #{tpu_custom_call.1} parent=1 // pred_fallthru
      _
    // Predicated region
    $region26: #{tpu_custom_call.1} parent=1 // pred_check
      _
    $region27: #{tpu_custom_call.1} parent=1 // pred_check_branch
      %57 = sbr.rel (0) target = $region29
    $region28: #{tpu_custom_call.1} parent=1 // pred_region
      %58 = dma.done [#allocation7], 1024
    $region29: #{tpu_custom_call.1} parent=1 // pred_fallthru
      _
    // Predicated region
    $region30: #{tpu_custom_call.1} parent=1 // pred_check
      _
    $region31: #{tpu_custom_call.1} parent=1 // pred_check_branch
      %60 = sbr.rel (0) target = $region33
    $region32: #{tpu_custom_call.1} parent=1 // pred_region
      %61 = dma.done [#allocation7], 1024
    $region33: #{tpu_custom_call.1} parent=1 // pred_fallthru
      _
    %p63 = scmp.eq.s32.totalorder 0, 0
    // Predicated region
    $region34: #{tpu_custom_call.1} parent=1 // pred_check
      %p64 = pneg %p63
    $region35: #{tpu_custom_call.1} parent=1 // pred_check_branch
      %66 = sbr.rel (%p64) target = $region37
    $region36: #{tpu_custom_call.1} parent=1 // pred_region
      %67 = vst [vmem:[#allocation2] sm:$0xff] 0.0
      %68 = vst [vmem:[#allocation2 + $0x8] sm:$0xff] 0.0
    $region37: #{tpu_custom_call.1} parent=1 // pred_fallthru
      _
    %v69 = vld [vmem:[#allocation3] sm:$0xff]
    %v70 = vld [vmem:[#allocation3 + $0x8] sm:$0xff]
    %v71 = vpack.c.bf16 %v70, %v69
    %v72 = vld [vmem:[#allocation6] sm:$0xf]
    %v73 = vld [vmem:[#allocation6 + $0x4] sm:$0xf]
    %v74 = vld [vmem:[#allocation6 + $0x8] sm:$0xf]
    %v75 = vld [vmem:[#allocation6 + $0xc] sm:$0xf]
    %v76 = vld [vmem:[#allocation6 + $0x10] sm:$0xf]
    %v77 = vld [vmem:[#allocation6 + $0x14] sm:$0xf]
    %v78 = vld [vmem:[#allocation6 + $0x18] sm:$0xf]
    %v79 = vld [vmem:[#allocation6 + $0x1c] sm:$0xf]
    %v80 = vld [vmem:[#allocation6 + $0x20] sm:$0xf]
    %v81 = vld [vmem:[#allocation6 + $0x24] sm:$0xf]
    %v82 = vld [vmem:[#allocation6 + $0x28] sm:$0xf]
    %v83 = vld [vmem:[#allocation6 + $0x2c] sm:$0xf]
    %v84 = vld [vmem:[#allocation6 + $0x30] sm:$0xf]
    %v85 = vld [vmem:[#allocation6 + $0x34] sm:$0xf]
    %v86 = vld [vmem:[#allocation6 + $0x38] sm:$0xf]
    %v87 = vld [vmem:[#allocation6 + $0x3c] sm:$0xf]
    %v88 = vld [vmem:[%s2] sm:$0x1]
    %v90 = vlaneseq
    %v91 = vshrl.u32 %v90, 7
    %v92 = vsub.s32 0, %v91
    %v93 = vrot.slane %v88, %v92
    %v111 = vunpack.c.l.b16 %v72
    %v112 = vunpack.c.l.b16 %v73
    %v113 = vunpack.c.l.b16 %v74
    %v114 = vunpack.c.l.b16 %v75
    %v115 = vunpack.c.l.b16 %v76
    %v116 = vunpack.c.l.b16 %v77
    %v117 = vunpack.c.l.b16 %v78
    %v118 = vunpack.c.l.b16 %v79
    %v119 = vunpack.c.l.b16 %v80
    %v120 = vunpack.c.l.b16 %v81
    %v121 = vunpack.c.l.b16 %v82
    %v122 = vunpack.c.l.b16 %v83
    %v123 = vunpack.c.l.b16 %v84
    %v124 = vunpack.c.l.b16 %v85
    %v125 = vunpack.c.l.b16 %v86
    %v126 = vunpack.c.l.b16 %v87
    %v127 = vpack.c.b16 %v112, %v111
    %v128 = vpack.c.b16 %v114, %v113
    %v129 = vpack.c.b16 %v116, %v115
    %v130 = vpack.c.b16 %v118, %v117
    %v131 = vpack.c.b16 %v120, %v119
    %v132 = vpack.c.b16 %v122, %v121
    %v133 = vpack.c.b16 %v124, %v123
    %v134 = vpack.c.b16 %v126, %v125
    %143 = vmatprep.subr.bf16.mxu0 0
    %144 = vmatpush1.bf16.msra.mxu0 %v127
    %145 = vmatprep.subr.bf16.mxu0 0
    %146 = vmatpush1.bf16.msra.mxu0 %v128
    %147 = vmatprep.subr.bf16.mxu0 0
    %148 = vmatpush1.bf16.msra.mxu0 %v129
    %149 = vmatprep.subr.bf16.mxu0 0
    %150 = vmatpush1.bf16.msra.mxu0 %v130
    %151 = vmatprep.subr.bf16.mxu0 0
    %152 = vmatpush1.bf16.msra.mxu0 %v131
    %153 = vmatprep.subr.bf16.mxu0 0
    %154 = vmatpush1.bf16.msra.mxu0 %v132
    %155 = vmatprep.subr.bf16.mxu0 0
    %156 = vmatpush1.bf16.msra.mxu0 %v133
    %157 = vmatprep.subr.bf16.mxu0 0
    %158 = vmatpush1.bf16.msra.mxu0 %v134
    %159 = vmatprep.subr.bf16.mxu0 0
    %160 = vmatpush1.bf16.msra.mxu0 0
    %161 = vmatprep.subr.bf16.mxu0 0
    %162 = vmatpush1.bf16.msra.mxu0 0
    %163 = vmatprep.subr.bf16.mxu0 0
    %164 = vmatpush1.bf16.msra.mxu0 0
    %165 = vmatprep.subr.bf16.mxu0 0
    %166 = vmatpush1.bf16.msra.mxu0 0
    %167 = vmatprep.subr.bf16.mxu0 0
    %168 = vmatpush1.bf16.msra.mxu0 0
    %169 = vmatprep.subr.bf16.mxu0 0
    %170 = vmatpush1.bf16.msra.mxu0 0
    %171 = vmatprep.subr.bf16.mxu0 0
    %172 = vmatpush1.bf16.msra.mxu0 0
    %173 = vmatprep.subr.bf16.mxu0 0
    %174 = vmatpush1.bf16.msra.mxu0 0
    %175 = vmatprep.mubr.bf16.mxu0 0
    %176 = vmatmul.mubr.bf16.gmra.mrb[0].mxu0 %v71
    %v177 = vpop.f32.mrb[0].mxu0
    %v178 = vadd.f32 %v93, %v177
    %v179 = vpop.f32.mrb[0].mxu0
    %v180 = vpop.f32.mrb[0].mxu0
    %v181 = vadd.f32 %v93, %v180
    %v182 = vpop.f32.mrb[0].mxu0
    %183 = vdwg.mxu0
    %v184 = vmax.f32 %v178, 0.0
    %v185 = vmax.f32 %v181, 0.0
    %v186 = vld [vmem:[#allocation2] sm:$0xff]
    %v187 = vld [vmem:[#allocation2 + $0x8] sm:$0xff]
    %v188 = vpack.c.bf16 %v185, %v184
    %v189 = vld [vmem:[#allocation8] sm:$0xf]
    %v190 = vld [vmem:[#allocation8 + $0x4] sm:$0xf]
    %v191 = vld [vmem:[#allocation8 + $0x8] sm:$0xf]
    %v192 = vld [vmem:[#allocation8 + $0xc] sm:$0xf]
    %v193 = vld [vmem:[#allocation8 + $0x10] sm:$0xf]
    %v194 = vld [vmem:[#allocation8 + $0x14] sm:$0xf]
    %v195 = vld [vmem:[#allocation8 + $0x18] sm:$0xf]
    %v196 = vld [vmem:[#allocation8 + $0x1c] sm:$0xf]
    %v197 = vld [vmem:[#allocation8 + $0x20] sm:$0xf]
    %v198 = vld [vmem:[#allocation8 + $0x24] sm:$0xf]
    %v199 = vld [vmem:[#allocation8 + $0x28] sm:$0xf]
    %v200 = vld [vmem:[#allocation8 + $0x2c] sm:$0xf]
    %v201 = vld [vmem:[#allocation8 + $0x30] sm:$0xf]
    %v202 = vld [vmem:[#allocation8 + $0x34] sm:$0xf]
    %v203 = vld [vmem:[#allocation8 + $0x38] sm:$0xf]
    %v204 = vld [vmem:[#allocation8 + $0x3c] sm:$0xf]
    %v221 = vunpack.c.l.b16 %v189
    %v222 = vunpack.c.l.b16 %v190
    %v223 = vunpack.c.l.b16 %v191
    %v224 = vunpack.c.l.b16 %v192
    %v225 = vunpack.c.l.b16 %v193
    %v226 = vunpack.c.l.b16 %v194
    %v227 = vunpack.c.l.b16 %v195
    %v228 = vunpack.c.l.b16 %v196
    %v229 = vunpack.c.l.b16 %v197
    %v230 = vunpack.c.l.b16 %v198
    %v231 = vunpack.c.l.b16 %v199
    %v232 = vunpack.c.l.b16 %v200
    %v233 = vunpack.c.l.b16 %v201
    %v234 = vunpack.c.l.b16 %v202
    %v235 = vunpack.c.l.b16 %v203
    %v236 = vunpack.c.l.b16 %v204
    %v237 = vpack.c.b16 %v222, %v221
    %v238 = vpack.c.b16 %v224, %v223
    %v239 = vpack.c.b16 %v226, %v225
    %v240 = vpack.c.b16 %v228, %v227
    %v241 = vpack.c.b16 %v230, %v229
    %v242 = vpack.c.b16 %v232, %v231
    %v243 = vpack.c.b16 %v234, %v233
    %v244 = vpack.c.b16 %v236, %v235
    %253 = vmatprep.subr.bf16.mxu0 0
    %254 = vmatpush1.bf16.msra.mxu0 %v237
    %255 = vmatprep.subr.bf16.mxu0 0
    %256 = vmatpush1.bf16.msra.mxu0 %v238
    %257 = vmatprep.subr.bf16.mxu0 0
    %258 = vmatpush1.bf16.msra.mxu0 %v239
    %259 = vmatprep.subr.bf16.mxu0 0
    %260 = vmatpush1.bf16.msra.mxu0 %v240
    %261 = vmatprep.subr.bf16.mxu0 0
    %262 = vmatpush1.bf16.msra.mxu0 %v241
    %263 = vmatprep.subr.bf16.mxu0 0
    %264 = vmatpush1.bf16.msra.mxu0 %v242
    %265 = vmatprep.subr.bf16.mxu0 0
    %266 = vmatpush1.bf16.msra.mxu0 %v243
    %267 = vmatprep.subr.bf16.mxu0 0
    %268 = vmatpush1.bf16.msra.mxu0 %v244
    %269 = vmatprep.subr.bf16.mxu0 0
    %270 = vmatpush1.bf16.msra.mxu0 0
    %271 = vmatprep.subr.bf16.mxu0 0
    %272 = vmatpush1.bf16.msra.mxu0 0
    %273 = vmatprep.subr.bf16.mxu0 0
    %274 = vmatpush1.bf16.msra.mxu0 0
    %275 = vmatprep.subr.bf16.mxu0 0
    %276 = vmatpush1.bf16.msra.mxu0 0
    %277 = vmatprep.subr.bf16.mxu0 0
    %278 = vmatpush1.bf16.msra.mxu0 0
    %279 = vmatprep.subr.bf16.mxu0 0
    %280 = vmatpush1.bf16.msra.mxu0 0
    %281 = vmatprep.subr.bf16.mxu0 0
    %282 = vmatpush1.bf16.msra.mxu0 0
    %283 = vmatprep.subr.bf16.mxu0 0
    %284 = vmatpush1.bf16.msra.mxu0 0
    %285 = vmatprep.mubr.bf16.mxu0 0
    %286 = vmatmul.mubr.bf16.gmra.mrb[0].mxu0 %v188
    %v287 = vpop.f32.mrb[0].mxu0
    %v288 = vadd.f32 0.0, %v287
    %v289 = vpop.f32.mrb[0].mxu0
    %v290 = vpop.f32.mrb[0].mxu0
    %v291 = vadd.f32 0.0, %v290
    %v292 = vpop.f32.mrb[0].mxu0
    %293 = vdwg.mxu0
    %v294 = vadd.f32 %v186, %v288
    %v295 = vadd.f32 %v187, %v291
    %296 = vst [vmem:[#allocation2] sm:$0xff] %v294
    %297 = vst [vmem:[#allocation2 + $0x8] sm:$0xff] %v295
    // Predicated region
    $region38: #{tpu_custom_call.1} parent=1 // pred_check
      %p298 = pneg %p63
    $region39: #{tpu_custom_call.1} parent=1 // pred_check_branch
      %300 = sbr.rel (%p298) target = $region41
    $region40: #{tpu_custom_call.1} parent=1 // pred_region
      %v301 = vld [vmem:[#allocation2] sm:$0xff]
      %v302 = vld [vmem:[#allocation2 + $0x8] sm:$0xff]
      %v303 = vld [vmem:[%s4] sm:$0x1]
      %v305 = vlaneseq
      %v306 = vshrl.u32 %v305, 7
      %v307 = vsub.s32 0, %v306
      %v308 = vrot.slane %v303, %v307
      %v310 = vadd.f32 %v301, %v308
      %v311 = vadd.f32 %v302, %v308
      %v312 = vsub.f32 0.0, %v310
      %v313 = vsub.f32 0.0, %v311
      %v314 = vmul.f32 %v312, 1.442695
      %v315 = vpow.pop %v314
      %v316 = vmul.f32 %v313, 1.442695
      %v317 = vpow.pop %v316
      %v318 = vadd.f32 %v315, 1.0
      %v319 = vadd.f32 %v317, 1.0
      %v320 = vrcp.pop %v318
      %v321 = vrcp.pop %v319
      %322 = vst [vmem:[#allocation9] sm:$0xff] %v320
      %323 = vst [vmem:[#allocation9 + $0x8] sm:$0xff] %v321
    $region41: #{tpu_custom_call.1} parent=1 // pred_fallthru
      _
    // Predicated region
    $region42: #{tpu_custom_call.1} parent=1 // pred_check
      _
    $region43: #{tpu_custom_call.1} parent=1 // pred_check_branch
      %325 = sbr.rel (0) target = $region45
    $region44: #{tpu_custom_call.1} parent=1 // pred_region
      %s327 = ssub.s32 256, 256
      %328 = vsyncadd [#allocation5], %s327
      %s329 = sshll.u32 [#allocation9], 4
      %s330 = int_to_ptr.vmem [resolvable:$true] %s329
      %335 = dma.vmem_to_hbm [thread:$0]  %s330, 256, %s5, [#allocation5], 128, 128, 8
    $region45: #{tpu_custom_call.1} parent=1 // pred_fallthru
      _
    // Predicated region
    $region46: #{tpu_custom_call.1} parent=1 // pred_check
      _
    $region47: #{tpu_custom_call.1} parent=1 // pred_check_branch
      %337 = sbr.rel (0) target = $region49
    $region48: #{tpu_custom_call.1} parent=1 // pred_region
      %338 = dma.done [#allocation5], 256
    $region49: #{tpu_custom_call.1} parent=1 // pred_fallthru
      _
    %339 = vsyncpa [#allocation4], 1
    %340 = vsyncpa [#allocation7], 1
    %341 = vsyncpa [#allocation5], 1

</llo_original>
